<compile_context>
chip_gen: v5e
topology: v5e:2x2
jax: 0.10.0
libtpu: 0.0.40
codegen_flags: <defaults>
</compile_context>

<pallas_src>
import math

import jax
import jax.numpy as jnp
from jax import lax
from jax.experimental import pallas as pl
from jax.experimental.pallas import tpu as pltpu

SHRINK_THRES = 0.0025
EPS_L1 = 1e-12       # F.normalize(p=1) default eps


def _cdiv(a, b):
    return -(-a // b)


def _round_up(x, m):
    return _cdiv(x, m) * m


def _mem_kernel(x_ref, w_ref, y_ref, att_ref):
    # x_ref  : (C, TL)       tokens on the lane axis (one image's tile)
    # w_ref  : (mem_dim, C)  memory weight (resident, tiny)
    # y_ref  : (C, TL)
    # att_ref: (mem_dim, TL)
    xt = x_ref[...]
    w = w_ref[...]

    # logits^T = W @ x^T -> (mem_dim, TL); MXU, f32 accumulation.
    logits = jnp.dot(w, xt, preferred_element_type=jnp.float32)

    # Softmax + hard_shrink_relu + L1-normalize, folded:
    #   softmax a = e / s;  hard-shrink keeps a > thres  <=>  e > thres * s;
    #   the final L1 renormalization cancels the softmax denominator, so we
    #   never need 1/s (one full-tensor EUP pass + several VALU passes saved).
    m = jnp.max(logits, axis=0, keepdims=True)
    e = jnp.exp(logits - m)
    s = jnp.sum(e, axis=0, keepdims=True)
    kept = jnp.where(e > SHRINK_THRES * s, e, 0.0)
    l1 = jnp.sum(kept, axis=0, keepdims=True)
    att = kept * pl.reciprocal(jnp.maximum(l1, EPS_L1), approx=True)

    # output^T = W^T @ att^T -> (C, TL); contract dim 0 of both operands so
    # the MXU consumes the transposed weight directly (no wt input needed).
    y = lax.dot_general(
        w, att.astype(w.dtype),
        dimension_numbers=(((0,), (0,)), ((), ())),
        preferred_element_type=jnp.float32,
    )

    y_ref[...] = y.astype(y_ref.dtype)
    att_ref[...] = att.astype(att_ref.dtype)


def mem_unit_pallas(x3, weight, *, tl=8192, att_dtype=None,
                    vmem_block_budget=16 * 1024 * 1024):
    """x3: (N, C, HW) tokens-on-lanes per image, weight: (mem_dim, C).

    Returns (y3, att3) of shapes (N, C, HW) and (N, mem_dim, HW).
    """
    N, C, HW = x3.shape
    mem_dim, fea_dim = weight.shape
    assert fea_dim == C
    att_dtype = x3.dtype if att_dtype is None else att_dtype
    itemsize = jnp.dtype(x3.dtype).itemsize

    hw_orig = HW
    if HW % 128 == 0:
        tl_eff = min(tl, HW)
        # v7x megacore: make sure the (parallel, parallel) grid has >= 2
        # blocks so both TensorCores get work.
        if N * _cdiv(HW, tl_eff) < 2 and HW >= 256:
            tl_eff = _round_up(_cdiv(HW, 2), 128)
    else:
        # Unaligned token count: prefer a full-extent block (no pad, no slice,
        # no masking needed); fall back to padding only if it would blow VMEM.
        per_step_bytes = 2 * (2 * C + mem_dim) * HW * itemsize  # dbl-buffered IO
        if per_step_bytes <= vmem_block_budget:
            tl_eff = HW
        else:
            # TODO(synk): rare path; an in-kernel iota mask against an SMEM
            # token count would avoid this pad/slice copy entirely.
            pad = _round_up(HW, 128) - HW
            x3 = jnp.pad(x3, ((0, 0), (0, 0), (0, pad)))
            HW = HW + pad
            tl_eff = min(tl, HW)

    nb = _cdiv(HW, tl_eff)

    cost = pl.CostEstimate(
        flops=4 * N * hw_orig * C * mem_dim,                    # two matmuls
        transcendentals=N * hw_orig * (mem_dim + 1),            # exp + recip
        bytes_accessed=(2 * C * N * hw_orig + mem_dim * C) * itemsize
        + mem_dim * N * hw_orig * jnp.dtype(att_dtype).itemsize,
    )

    y3, att3 = pl.pallas_call(
        _mem_kernel,
        out_shape=(
            jax.ShapeDtypeStruct((N, C, HW), x3.dtype),
            jax.ShapeDtypeStruct((N, mem_dim, HW), att_dtype),
        ),
        grid_spec=pltpu.PrefetchScalarGridSpec(
            num_scalar_prefetch=0,
            grid=(N, nb),
            in_specs=[
                pl.BlockSpec((pl.Squeezed(), C, tl_eff), lambda n, j: (n, 0, j)),
                pl.BlockSpec((mem_dim, C), lambda n, j: (0, 0)),
            ],
            out_specs=[
                pl.BlockSpec((pl.Squeezed(), C, tl_eff), lambda n, j: (n, 0, j)),
                pl.BlockSpec((pl.Squeezed(), mem_dim, tl_eff), lambda n, j: (n, 0, j)),
            ],
        ),
        compiler_params=pltpu.CompilerParams(
            dimension_semantics=("parallel", "parallel"),
            vmem_limit_bytes=32 * 1024 * 1024,
        ),
        cost_estimate=cost,
    )(x3, weight)

    if HW != hw_orig:
        y3 = y3[:, :, :hw_orig]
        att3 = att3[:, :, :hw_orig]
    return y3, att3


def mem_module_forward(x, weight, *, tl=8192, att_dtype=None):
    """MemModule.forward for 3-D / 4-D / 5-D channel-second inputs (e.g. NCHW)."""
    s = x.shape
    nd = x.ndim
    assert nd in (3, 4, 5), "wrong feature map size"
    N, C = s[0], s[1]
    spatial = tuple(s[2:])
    HW = 1
    for d in spatial:
        HW *= d
    mem_dim = weight.shape[0]

    # Contiguous NC... -> (N, C, HW) is a pure reshape: no data movement.
    x3 = x.reshape(N, C, HW)
    y3, att3 = mem_unit_pallas(x3, weight, tl=tl, att_dtype=att_dtype)

    y = y3.reshape((N, C) + spatial)
    att = att3.reshape((N, mem_dim) + spatial)
    # NOTE: the `train`/detach flag of the PyTorch module only affects
    # autograd, not forward values, so it has no kernel-side equivalent.
    return {"output": y, "att": att}


def _reference_forward(x, weight):
    """Pure-JAX reference (mirrors the PyTorch module's channels-last path)."""
    s = x.shape
    nd = x.ndim
    C = s[1]
    mem_dim = weight.shape[0]
    perm = (0,) + tuple(range(2, nd)) + (1,)
    xf = jnp.transpose(x, perm).reshape(-1, C).astype(jnp.float32)
    w = weight.astype(jnp.float32)
    logits = xf @ w.T
    att = jax.nn.softmax(logits, axis=1)
    shifted = att - SHRINK_THRES
    att = jnp.maximum(shifted, 0.0) * att / (jnp.abs(shifted) + 1e-12)
    att = att / jnp.maximum(jnp.sum(jnp.abs(att), axis=1, keepdims=True), EPS_L1)
    y = att @ w
    rest = (s[0],) + tuple(s[2:])
    back = (0, nd - 1) + tuple(range(1, nd - 1))
    y = jnp.transpose(y.reshape(rest + (C,)), back)
    att = jnp.transpose(att.reshape(rest + (mem_dim,)), back)
    return y, att


if __name__ == "__main__":
    N, C, H, W = 2, 32, 16, 16      # fea_dim = C
    mem_dim = 64

    key = jax.random.PRNGKey(0)
    k_x, k_w, k_x2, k_x3 = jax.random.split(key, 4)

    x = jax.random.normal(k_x, (N, C, H, W), dtype=jnp.float32)
    # Matches PyTorch reset_parameters: U(-stdv, stdv), stdv = 1/sqrt(fea_dim).
    stdv = 1.0 / math.sqrt(C)
    weight = jax.random.uniform(
        k_w, (mem_dim, C), minval=-stdv, maxval=stdv, dtype=jnp.float32
    )

    fwd = jax.jit(mem_module_forward)

    # 1) 4-D NCHW, HW multiple of 128, two images -> grid (2, 1).
    out = fwd(x, weight)
    y = jax.block_until_ready(out["output"])
    att = jax.block_until_ready(out["att"])
    y_ref, att_ref = _reference_forward(x, weight)
    assert y.shape == (N, C, H, W)
    assert att.shape == (N, mem_dim, H, W)
    assert jnp.allclose(y, y_ref, atol=5e-3, rtol=5e-3)
    assert jnp.allclose(att, att_ref, atol=5e-3, rtol=5e-3)

    # 2) 4-D, token count NOT a multiple of 128 -> full-extent token block.
    x2 = jax.random.normal(k_x2, (1, C, 9, 13), dtype=jnp.float32)
    out2 = fwd(x2, weight)
    y2 = jax.block_until_ready(out2["output"])
    att2 = jax.block_until_ready(out2["att"])
    y2_ref, att2_ref = _reference_forward(x2, weight)
    assert y2.shape == (1, C, 9, 13)
    assert att2.shape == (1, mem_dim, 9, 13)
    assert jnp.allclose(y2, y2_ref, atol=5e-3, rtol=5e-3)
    assert jnp.allclose(att2, att2_ref, atol=5e-3, rtol=5e-3)

    # 3) 3-D single image -> exercises the megacore token split (grid (1, 2)).
    x3 = jax.random.normal(k_x3, (1, C, 512), dtype=jnp.float32)
    out3 = fwd(x3, weight)
    y3 = jax.block_until_ready(out3["output"])
    att3 = jax.block_until_ready(out3["att"])
    y3_ref, att3_ref = _reference_forward(x3, weight)
    assert y3.shape == (1, C, 512)
    assert att3.shape == (1, mem_dim, 512)
    assert jnp.allclose(y3, y3_ref, atol=5e-3, rtol=5e-3)
    assert jnp.allclose(att3, att3_ref, atol=5e-3, rtol=5e-3)

    print("KERNEL_OK")
</pallas_src>

<mosaic_0001>
module attributes {stable_mosaic.version = 11 : i64} {
  func.func @_mem_kernel(%arg0: i32, %arg1: i32, %arg2: memref<1x32x256xf32, #tpu.memory_space<vmem>>, %arg3: memref<64x32xf32, #tpu.memory_space<vmem>>, %arg4: memref<1x32x256xf32, #tpu.memory_space<vmem>>, %arg5: memref<1x64x256xf32, #tpu.memory_space<vmem>>) attributes {dimension_semantics = [#tpu.dimension_semantics<parallel>, #tpu.dimension_semantics<parallel>], iteration_bounds = array<i64: 2, 1>, scalar_prefetch = 0 : i64, scratch_operands = 0 : i64, tpu.core_type = #tpu.core_type<tc>, window_params = [{transform_indices = @transform_0, window_bounds = array<i64: 1, 32, 256>}, {pipeline_mode = #tpu.pipeline_mode<synchronous>, transform_indices = @transform_1, window_bounds = array<i64: 64, 32>}, {transform_indices = @transform_2, window_bounds = array<i64: 1, 32, 256>}, {transform_indices = @transform_3, window_bounds = array<i64: 1, 64, 256>}]} {
    %c0 = arith.constant 0 : index
    %c0_0 = arith.constant 0 : index
    %c0_1 = arith.constant 0 : index
    %0 = vector.load %arg2[%c0, %c0_0, %c0_1] : memref<1x32x256xf32, #tpu.memory_space<vmem>>, vector<1x32x256xf32>
    %1 = vector.shape_cast %0 : vector<1x32x256xf32> to vector<32x256xf32>
    %c0_2 = arith.constant 0 : index
    %c0_3 = arith.constant 0 : index
    %2 = vector.load %arg3[%c0_2, %c0_3] : memref<64x32xf32, #tpu.memory_space<vmem>>, vector<64x32xf32>
    %cst = arith.constant dense<0.000000e+00> : vector<64x256xf32>
    %3 = tpu.matmul %2, %1, %cst {dimension_numbers = #tpu.dot_dimension_numbers<[1], [0], [0], [1], [0, 0, 1, 1], [], []>} : vector<64x32xf32>, vector<32x256xf32>, vector<64x256xf32> -> vector<64x256xf32>
    %cst_4 = arith.constant dense<0xFF800000> : vector<256xf32>
    %4 = vector.multi_reduction <maximumf>, %3, %cst_4 [0] : vector<64x256xf32> to vector<256xf32>
    %5 = vector.shape_cast %4 : vector<256xf32> to vector<1x256xf32>
    %6 = vector.broadcast %5 : vector<1x256xf32> to vector<64x256xf32>
    %7 = arith.subf %3, %6 : vector<64x256xf32>
    %8 = math.exp %7 : vector<64x256xf32>
    %cst_5 = arith.constant dense<0.000000e+00> : vector<256xf32>
    %9 = vector.multi_reduction <add>, %8, %cst_5 [0] : vector<64x256xf32> to vector<256xf32>
    %10 = vector.shape_cast %9 : vector<256xf32> to vector<1x256xf32>
    %cst_6 = arith.constant 2.500000e-03 : f32
    %11 = vector.broadcast %cst_6 : f32 to vector<1x256xf32>
    %12 = arith.mulf %11, %10 : vector<1x256xf32>
    %13 = vector.broadcast %12 : vector<1x256xf32> to vector<64x256xf32>
    %14 = arith.cmpf ogt, %8, %13 : vector<64x256xf32>
    %cst_7 = arith.constant 0.000000e+00 : f32
    %15 = vector.broadcast %cst_7 : f32 to vector<64x256xf32>
    %16 = arith.select %14, %8, %15 : vector<64x256xi1>, vector<64x256xf32>
    %cst_8 = arith.constant dense<0.000000e+00> : vector<256xf32>
    %17 = vector.multi_reduction <add>, %16, %cst_8 [0] : vector<64x256xf32> to vector<256xf32>
    %18 = vector.shape_cast %17 : vector<256xf32> to vector<1x256xf32>
    %cst_9 = arith.constant 9.99999996E-13 : f32
    %19 = vector.broadcast %cst_9 : f32 to vector<1x256xf32>
    %20 = arith.maximumf %18, %19 : vector<1x256xf32>
    %21 = tpu.reciprocal %20 {approx = true} : vector<1x256xf32> -> vector<1x256xf32>
    %22 = vector.broadcast %21 : vector<1x256xf32> to vector<64x256xf32>
    %23 = arith.mulf %16, %22 : vector<64x256xf32>
    %cst_10 = arith.constant dense<0.000000e+00> : vector<32x256xf32>
    %24 = tpu.matmul %2, %23, %cst_10 {dimension_numbers = #tpu.dot_dimension_numbers<[0], [0], [1], [1], [0, 1, 1, 1], [], []>} : vector<64x32xf32>, vector<64x256xf32>, vector<32x256xf32> -> vector<32x256xf32>
    %c0_11 = arith.constant 0 : index
    %c0_12 = arith.constant 0 : index
    %c0_13 = arith.constant 0 : index
    %25 = vector.load %arg4[%c0_11, %c0_12, %c0_13] : memref<1x32x256xf32, #tpu.memory_space<vmem>>, vector<1x32x256xf32>
    %26 = vector.shape_cast %25 : vector<1x32x256xf32> to vector<32x256xf32>
    %27 = vector.shape_cast %24 : vector<32x256xf32> to vector<1x32x256xf32>
    tpu.vector_store %arg4[%c0_11, %c0_12, %c0_13], %27 {strides = array<i32>} : memref<1x32x256xf32, #tpu.memory_space<vmem>>, vector<1x32x256xf32>,
    %c0_14 = arith.constant 0 : index
    %c0_15 = arith.constant 0 : index
    %c0_16 = arith.constant 0 : index
    %28 = vector.load %arg5[%c0_14, %c0_15, %c0_16] : memref<1x64x256xf32, #tpu.memory_space<vmem>>, vector<1x64x256xf32>
    %29 = vector.shape_cast %28 : vector<1x64x256xf32> to vector<64x256xf32>
    %30 = vector.shape_cast %23 : vector<64x256xf32> to vector<1x64x256xf32>
    tpu.vector_store %arg5[%c0_14, %c0_15, %c0_16], %30 {strides = array<i32>} : memref<1x64x256xf32, #tpu.memory_space<vmem>>, vector<1x64x256xf32>,
    return
  }
  func.func @transform_0(%arg0: i32, %arg1: i32) -> (i32, i32, i32) {
    %c0_i32 = arith.constant 0 : i32
    %c0_i32_0 = arith.constant 0 : i32
    return %arg0, %c0_i32, %arg1 : i32, i32, i32
  }
  func.func @transform_1(%arg0: i32, %arg1: i32) -> (i32, i32) {
    %c0_i32 = arith.constant 0 : i32
    %c0_i32_0 = arith.constant 0 : i32
    %c0_i32_1 = arith.constant 0 : i32
    return %c0_i32, %c0_i32_0 : i32, i32
  }
  func.func @transform_2(%arg0: i32, %arg1: i32) -> (i32, i32, i32) {
    %c0_i32 = arith.constant 0 : i32
    %c0_i32_0 = arith.constant 0 : i32
    return %arg0, %c0_i32, %arg1 : i32, i32, i32
  }
  func.func @transform_3(%arg0: i32, %arg1: i32) -> (i32, i32, i32) {
    %c0_i32 = arith.constant 0 : i32
    %c0_i32_0 = arith.constant 0 : i32
    return %arg0, %c0_i32, %arg1 : i32, i32, i32
  }
}

</mosaic_0001>

<llo_original>
// kernel: mem_module_forward.1
$region0: #{mem_module_forward.1}
  #allocation0 [shape = 'u32[]', space=smem, size = 0x4, offset = 0x4, fixed_abs, tag = 'smem constant byte address 0x4 - core index']
  #allocation1 [shape = 'u32[72,128]{1,0:T(1,128)}', space=vmem, size = 0x9000, scoped, tag = 'internal scratch']
  %s0 = inlined_call_operand.vmem [shape: f32[2,32,256], index: 0, kind: input, shape index: {}]
  %s1 = inlined_call_operand.vmem [shape: f32[64,32], index: 1, kind: input, shape index: {}]
  %s2 = inlined_call_operand.vmem [shape: f32[2,32,256], index: 2, kind: output, shape index: {0}]
  %s3 = inlined_call_operand.vmem [shape: f32[2,64,256], index: 3, kind: output, shape index: {1}]
  %4 = xla_tuple %s2, %s3
  %s5 = sld [smem:[#allocation0]]
  $region49: #{mem_module_forward.1} parent=0
    _
  %s7 = ssub.s32 1, %s5
  %s8 = scalar_select 0, %s7, %s5
  loop: start=0, step=1, limit=4
  $region2: #{mem_module_forward.1} parent=0 // loop_pre_header
    _
  $region3: #{mem_module_forward.1} parent=0 // loop_header
    %s10 = sphi 0, %s14
    %p11 = scmp.ge.s32.totalorder %s10, 4
    %s17 = sphi 0, %s29
    %s18 = sphi 0, %s25
    %s19 = sphi 0, %s17
    %s20 = sphi 0, %s18
    %s21 = sphi 0, %s19
    %s22 = sphi 0, %s20
    %s34 = sphi 0, %s36
    %s37 = sphi 0, %s34
    %s38 = sphi 0, %s37
    %s54 = sphi 0, %s38
    %s58 = sphi 0, %s58
    %s60 = sphi 0, %s58
    %s61 = sphi 0, %s60
    %s75 = sphi 0, %s61
    %s83 = sphi 0, %s85
    %s86 = sphi 0, %s83
    %s87 = sphi 0, %s86
    %s103 = sphi 0, %s87
    %s111 = sphi 0, %s113
    %s114 = sphi 0, %s111
    %s115 = sphi 0, %s114
    %s131 = sphi 0, %s115
  $region4: #{mem_module_forward.1} parent=0 // loop_header_branch
    %13 = sbr.rel (%p11) target = $region8
  $region5: #{mem_module_forward.1} parent=0 // loop_body
    %s15 = ssub.s32 %s10, 1
    %s16 = ssub.s32 %s10, 2
    %s23 = sadd.s32 1, %s18
    %p24 = scmp.ge.s32.totalorder %s23, 1
    %s25 = scalar_select %p24, 0, %s23
    %s26 = sadd.s32 1, %s17
    %s27 = scalar_select %p24, %s26, %s17
    %p28 = scmp.ge.s32.totalorder %s27, 2
    %s29 = scalar_select %p28, 0, %s27
    %s30 = ssub.s32 %s17, %s29
    %s31 = ssub.s32 %s18, %s25
    %s32 = sor.u32 %s30, %s31
    %p33 = scmp.eq.s32.totalorder %s32, 0
    %s35 = sadd.s32 %s34, 1
    %s36 = scalar_select %p33, %s34, %s35
    %p39 = pneg %p33
    %p40 = scmp.eq.s32.totalorder %s10, 1
    %p41 = por %p39, %p40
    %p42 = scmp.ne.s32.totalorder %s34, %s37
    %p43 = scmp.eq.s32.totalorder %s10, 0
    %p44 = por %p42, %p43
    %p45 = scmp.ne.s32.totalorder %s34, %s37
    %p46 = scmp.eq.s32.totalorder %s15, 1
    %p47 = por %p45, %p46
    %p48 = scmp.ne.s32.totalorder %s37, %s38
    %p49 = scmp.eq.s32.totalorder %s15, 0
    %p50 = por %p48, %p49
    %p51 = scmp.ne.s32.totalorder %s37, %s38
    %p52 = scmp.eq.s32.totalorder %s16, 1
    %p53 = por %p51, %p52
    %p55 = scmp.ne.s32.totalorder %s38, %s54
    %p56 = scmp.eq.s32.totalorder %s16, 0
    %p57 = por %p55, %p56
    %s59 = sadd.s32 %s58, 1
    %p62 = scmp.eq.s32.totalorder %s10, 1
    %p63 = scmp.ne.s32.totalorder %s58, %s60
    %p64 = scmp.eq.s32.totalorder %s10, 0
    %p65 = por %p63, %p64
    %p66 = scmp.ne.s32.totalorder %s58, %s60
    %p67 = scmp.eq.s32.totalorder %s15, 1
    %p68 = por %p66, %p67
    %p69 = scmp.ne.s32.totalorder %s60, %s61
    %p70 = scmp.eq.s32.totalorder %s15, 0
    %p71 = por %p69, %p70
    %p72 = scmp.ne.s32.totalorder %s60, %s61
    %p73 = scmp.eq.s32.totalorder %s16, 1
    %p74 = por %p72, %p73
    %p76 = scmp.ne.s32.totalorder %s61, %s75
    %p77 = scmp.eq.s32.totalorder %s16, 0
    %p78 = por %p76, %p77
    %s79 = ssub.s32 %s17, %s29
    %s80 = ssub.s32 %s18, %s25
    %s81 = sor.u32 %s79, %s80
    %p82 = scmp.eq.s32.totalorder %s81, 0
    %s84 = sadd.s32 %s83, 1
    %s85 = scalar_select %p82, %s83, %s84
    %p88 = pneg %p82
    %p89 = scmp.eq.s32.totalorder %s10, 1
    %p90 = por %p88, %p89
    %p91 = scmp.ne.s32.totalorder %s83, %s86
    %p92 = scmp.eq.s32.totalorder %s10, 0
    %p93 = por %p91, %p92
    %p94 = scmp.ne.s32.totalorder %s83, %s86
    %p95 = scmp.eq.s32.totalorder %s15, 1
    %p96 = por %p94, %p95
    %p97 = scmp.ne.s32.totalorder %s86, %s87
    %p98 = scmp.eq.s32.totalorder %s15, 0
    %p99 = por %p97, %p98
    %p100 = scmp.ne.s32.totalorder %s86, %s87
    %p101 = scmp.eq.s32.totalorder %s16, 1
    %p102 = por %p100, %p101
    %p104 = scmp.ne.s32.totalorder %s87, %s103
    %p105 = scmp.eq.s32.totalorder %s16, 0
    %p106 = por %p104, %p105
    %s107 = ssub.s32 %s17, %s29
    %s108 = ssub.s32 %s18, %s25
    %s109 = sor.u32 %s107, %s108
    %p110 = scmp.eq.s32.totalorder %s109, 0
    %s112 = sadd.s32 %s111, 1
    %s113 = scalar_select %p110, %s111, %s112
    %p116 = pneg %p110
    %p117 = scmp.eq.s32.totalorder %s10, 1
    %p118 = por %p116, %p117
    %p119 = scmp.ne.s32.totalorder %s111, %s114
    %p120 = scmp.eq.s32.totalorder %s10, 0
    %p121 = por %p119, %p120
    %p122 = scmp.ne.s32.totalorder %s111, %s114
    %p123 = scmp.eq.s32.totalorder %s15, 1
    %p124 = por %p122, %p123
    %p125 = scmp.ne.s32.totalorder %s114, %s115
    %p126 = scmp.eq.s32.totalorder %s15, 0
    %p127 = por %p125, %p126
    %p128 = scmp.ne.s32.totalorder %s114, %s115
    %p129 = scmp.eq.s32.totalorder %s16, 1
    %p130 = por %p128, %p129
    %p132 = scmp.ne.s32.totalorder %s115, %s131
    %p133 = scmp.eq.s32.totalorder %s16, 0
    %p134 = por %p132, %p133
    %p135 = scmp.le.s32.totalorder 1, %s10
    %p136 = scmp.lt.s32.totalorder %s10, 3
    %p137 = pnand %p135, %p136
    %p138 = pneg %p137
    // Predicated region
    $region9: #{mem_module_forward.1} parent=5 // pred_check
      _
    $region10: #{mem_module_forward.1} parent=5 // pred_check_branch
      %140 = sbr.rel (%p137) target = $region12
    $region11: #{mem_module_forward.1} parent=5 // pred_region
      %s141 = ssub.s32 %s10, 1
      // Predicated region
      $region13: #{mem_module_forward.1} parent=11 // pred_check
        %p142 = pneg %p71
      $region14: #{mem_module_forward.1} parent=11 // pred_check_branch
        %144 = sbr.rel (%p142) target = $region16
      $region15: #{mem_module_forward.1} parent=11 // pred_region
        _
      $region16: #{mem_module_forward.1} parent=11 // pred_fallthru
        _
    $region12: #{mem_module_forward.1} parent=5 // pred_fallthru
      _
    %p145 = scmp.lt.s32.totalorder %s10, 2
    // Predicated region
    $region17: #{mem_module_forward.1} parent=5 // pred_check
      %p146 = pneg %p145
    $region18: #{mem_module_forward.1} parent=5 // pred_check_branch
      %148 = sbr.rel (%p146) target = $region20
    $region19: #{mem_module_forward.1} parent=5 // pred_region
      // Predicated region
      $region21: #{mem_module_forward.1} parent=19 // pred_check
        %p149 = pneg %p44
      $region22: #{mem_module_forward.1} parent=19 // pred_check_branch
        %151 = sbr.rel (%p149) target = $region24
      $region23: #{mem_module_forward.1} parent=19 // pred_region
        %s152 = smul.u32 2, %s18
        %p153 = scmp.lt.s32.totalorder %s17, 1
        %s154 = scalar_select %p153, %s17, 1
        %p155 = scmp.lt.s32.totalorder %s152, 1
        %s156 = scalar_select %p155, %s152, 1
        %s157 = smul.addr %s154, 8
        %s158 = sadd.s32 %s156, %s157
        %s159 = smul.addr %s158, 8
        %s160 = scalar_lea.vmem %s0, %s159
        %s161 = smul.u32 2, %s18
      $region24: #{mem_module_forward.1} parent=19 // pred_fallthru
        _
    $region20: #{mem_module_forward.1} parent=5 // pred_fallthru
      _
    %p162 = scmp.le.s32.totalorder 1, %s10
    %p163 = scmp.lt.s32.totalorder %s10, 3
    %p164 = pnand %p162, %p163
    %p165 = pneg %p164
    // Predicated region
    $region25: #{mem_module_forward.1} parent=5 // pred_check
      _
    $region26: #{mem_module_forward.1} parent=5 // pred_check_branch
      %167 = sbr.rel (%p164) target = $region28
    $region27: #{mem_module_forward.1} parent=5 // pred_region
      %s168 = ssub.s32 %s10, 1
      %s169 = smul.u32 2, %s20
      %p170 = scmp.lt.s32.totalorder %s19, 1
      %s171 = scalar_select %p170, %s19, 1
      %p172 = scmp.lt.s32.totalorder %s169, 1
      %s173 = scalar_select %p172, %s169, 1
      %s174 = smul.addr %s171, 8
      %s175 = sadd.s32 %s173, %s174
      %s176 = smul.addr %s175, 8
      %s177 = scalar_lea.vmem %s0, %s176
      %p178 = pneg %p50
      %p179 = pneg %p47
      %p180 = pneg %p71
      %p181 = pneg %p68
      %p182 = pneg %p99
      %p183 = pneg %p96
      %s184 = smul.u32 2, %s20
      %p185 = scmp.lt.s32.totalorder %s19, 1
      %s186 = scalar_select %p185, %s19, 1
      %p187 = scmp.lt.s32.totalorder %s184, 1
      %s188 = scalar_select %p187, %s184, 1
      %s189 = smul.addr %s186, 8
      %s190 = sadd.s32 %s188, %s189
      %s191 = smul.addr %s190, 8
      %s192 = scalar_lea.vmem %s2, %s191
      %p193 = pneg %p127
      %p194 = pneg %p124
      %s195 = smul.u32 2, %s20
      %p196 = scmp.lt.s32.totalorder %s19, 1
      %s197 = scalar_select %p196, %s19, 1
      %p198 = scmp.lt.s32.totalorder %s195, 1
      %s199 = scalar_select %p198, %s195, 1
      %s200 = smul.addr %s197, 16
      %s201 = sadd.s32 %s199, %s200
      %s202 = smul.addr %s201, 8
      %s203 = scalar_lea.vmem %s3, %s202
      %s204 = smul.u32 2, %s20
      %p205 = scmp.lt.s32.totalorder %s19, 1
      %s206 = scalar_select %p205, %s19, 1
      %p207 = scmp.lt.s32.totalorder %s204, 1
      %s208 = scalar_select %p207, %s204, 1
      %s209 = smul.addr %s206, 8
      %s210 = sadd.s32 %s208, %s209
      %s211 = smul.addr %s210, 8
      %s212 = scalar_lea.vmem %s0, %s211
      %s213 = smul.u32 2, %s20
      %s214 = smul.u32 2, %s20
      %p215 = scmp.lt.s32.totalorder %s19, 1
      %s216 = scalar_select %p215, %s19, 1
      %p217 = scmp.lt.s32.totalorder %s214, 1
      %s218 = scalar_select %p217, %s214, 1
      %s219 = smul.addr %s216, 8
      %s220 = sadd.s32 %s218, %s219
      %s221 = smul.addr %s220, 8
      %s222 = scalar_lea.vmem %s2, %s221
      %s223 = smul.u32 2, %s20
      %s224 = smul.u32 2, %s20
      %p225 = scmp.lt.s32.totalorder %s19, 1
      %s226 = scalar_select %p225, %s19, 1
      %p227 = scmp.lt.s32.totalorder %s224, 1
      %s228 = scalar_select %p227, %s224, 1
      %s229 = smul.addr %s226, 16
      %s230 = sadd.s32 %s228, %s229
      %s231 = smul.addr %s230, 8
      %s232 = scalar_lea.vmem %s3, %s231
      %s233 = smul.u32 2, %s20
      %v234 = vld [vmem:[%s212] sm:$0xff]
      %v235 = vld [vmem:[%s212 + $0x8] sm:$0xff]
      %v236 = vld [vmem:[%s212 + $0x10] sm:$0xff]
      %v237 = vld [vmem:[%s212 + $0x18] sm:$0xff]
      %v238 = vld [vmem:[%s212 + $0x20] sm:$0xff]
      %v239 = vld [vmem:[%s212 + $0x28] sm:$0xff]
      %v240 = vld [vmem:[%s212 + $0x30] sm:$0xff]
      %v241 = vld [vmem:[%s212 + $0x38] sm:$0xff]
      %v242 = vld [vmem:[%s1] sm:$0xff]
      %v243 = vld [vmem:[%s1 + $0x8] sm:$0xff]
      %v244 = vld [vmem:[%s1 + $0x10] sm:$0xff]
      %v245 = vld [vmem:[%s1 + $0x18] sm:$0xff]
      %v246 = vld [vmem:[%s1 + $0x20] sm:$0xff]
      %v247 = vld [vmem:[%s1 + $0x28] sm:$0xff]
      %v248 = vld [vmem:[%s1 + $0x30] sm:$0xff]
      %v249 = vld [vmem:[%s1 + $0x38] sm:$0xff]
      %vm250 = vcmask 261120
      %v252 = vsel %vm250, %v242, 0
      %v255 = vsel %vm250, %v243, 0
      %v258 = vsel %vm250, %v244, 0
      %v261 = vsel %vm250, %v245, 0
      %v264 = vsel %vm250, %v246, 0
      %v267 = vsel %vm250, %v247, 0
      %v270 = vsel %vm250, %v248, 0
      %v273 = vsel %vm250, %v249, 0
      %275 = vmatpush.msra.mxu0 0.0
      %276 = vmatpush.msra.mxu0 0.0
      %277 = vmatpush.msra.mxu0 0.0
      %278 = vmatpush.msra.mxu0 0.0
      %279 = vmatpush.msra.mxu0 0.0
      %280 = vmatpush.msra.mxu0 0.0
      %281 = vmatpush.msra.mxu0 0.0
      %282 = vmatpush.msra.mxu0 0.0
      %283 = vmatpush.msra.mxu0 0.0
      %284 = vmatpush.msra.mxu0 0.0
      %285 = vmatpush.msra.mxu0 0.0
      %286 = vmatpush.msra.mxu0 0.0
      %287 = vmatpush.msra.mxu0 %v240
      %288 = vmatpush.msra.mxu0 %v238
      %289 = vmatpush.msra.mxu0 %v236
      %290 = vmatpush.msra.mxu0 %v234
      %291 = vmatmul.f32.gmra.mxu0 %v252
      %v292 = vpop.f32.mrf.mxu0
      %v293 = vadd.f32 0.0, %v292
      %294 = vmatmul.f32.gmra.mxu0 %v255
      %v295 = vpop.f32.mrf.mxu0
      %v296 = vadd.f32 0.0, %v295
      %297 = vmatmul.f32.gmra.mxu0 %v258
      %v298 = vpop.f32.mrf.mxu0
      %v299 = vadd.f32 0.0, %v298
      %300 = vmatmul.f32.gmra.mxu0 %v261
      %v301 = vpop.f32.mrf.mxu0
      %v302 = vadd.f32 0.0, %v301
      %303 = vmatmul.f32.gmra.mxu0 %v264
      %v304 = vpop.f32.mrf.mxu0
      %v305 = vadd.f32 0.0, %v304
      %306 = vmatmul.f32.gmra.mxu0 %v267
      %v307 = vpop.f32.mrf.mxu0
      %v308 = vadd.f32 0.0, %v307
      %309 = vmatmul.f32.gmra.mxu0 %v270
      %v310 = vpop.f32.mrf.mxu0
      %v311 = vadd.f32 0.0, %v310
      %312 = vmatmul.f32.gmra.mxu0 %v273
      %v313 = vpop.f32.mrf.mxu0
      %v314 = vadd.f32 0.0, %v313
      %315 = vdwg.mxu0
      %316 = vmatpush.msra.mxu0 0.0
      %317 = vmatpush.msra.mxu0 0.0
      %318 = vmatpush.msra.mxu0 0.0
      %319 = vmatpush.msra.mxu0 0.0
      %320 = vmatpush.msra.mxu0 0.0
      %321 = vmatpush.msra.mxu0 0.0
      %322 = vmatpush.msra.mxu0 0.0
      %323 = vmatpush.msra.mxu0 0.0
      %324 = vmatpush.msra.mxu0 0.0
      %325 = vmatpush.msra.mxu0 0.0
      %326 = vmatpush.msra.mxu0 0.0
      %327 = vmatpush.msra.mxu0 0.0
      %328 = vmatpush.msra.mxu0 %v241
      %329 = vmatpush.msra.mxu0 %v239
      %330 = vmatpush.msra.mxu0 %v237
      %331 = vmatpush.msra.mxu0 %v235
      %332 = vmatmul.f32.gmra.mxu0 %v252
      %v333 = vpop.f32.mrf.mxu0
      %v334 = vadd.f32 0.0, %v333
      %335 = vmatmul.f32.gmra.mxu0 %v255
      %v336 = vpop.f32.mrf.mxu0
      %v337 = vadd.f32 0.0, %v336
      %338 = vmatmul.f32.gmra.mxu0 %v258
      %v339 = vpop.f32.mrf.mxu0
      %v340 = vadd.f32 0.0, %v339
      %341 = vmatmul.f32.gmra.mxu0 %v261
      %v342 = vpop.f32.mrf.mxu0
      %v343 = vadd.f32 0.0, %v342
      %344 = vmatmul.f32.gmra.mxu0 %v264
      %v345 = vpop.f32.mrf.mxu0
      %v346 = vadd.f32 0.0, %v345
      %347 = vmatmul.f32.gmra.mxu0 %v267
      %v348 = vpop.f32.mrf.mxu0
      %v349 = vadd.f32 0.0, %v348
      %350 = vmatmul.f32.gmra.mxu0 %v270
      %v351 = vpop.f32.mrf.mxu0
      %v352 = vadd.f32 0.0, %v351
      %353 = vmatmul.f32.gmra.mxu0 %v273
      %v354 = vpop.f32.mrf.mxu0
      %v355 = vadd.f32 0.0, %v354
      %356 = vdwg.mxu0
      %v357 = vmax.f32 %v293, %v299
      %v358 = vmax.f32 %v296, %v302
      %v359 = vmax.f32 %v357, %v305
      %v360 = vmax.f32 %v358, %v308
      %v361 = vmax.f32 %v359, %v311
      %v362 = vmax.f32 %v360, %v314
      %v363 = vmax.f32 %v361, %v362
      %v364 = vrot.slane %v363, 4
      %v365 = vmax.f32 %v363, %v364
      %v366 = vrot.slane %v365, 2
      %v367 = vmax.f32 %v365, %v366
      %v368 = vrot.slane %v367, 1
      %v369 = vmax.f32 %v367, %v368
      %v370 = vmax.f32 %v334, %v340
      %v371 = vmax.f32 %v337, %v343
      %v372 = vmax.f32 %v370, %v346
      %v373 = vmax.f32 %v371, %v349
      %v374 = vmax.f32 %v372, %v352
      %v375 = vmax.f32 %v373, %v355
      %v376 = vmax.f32 %v374, %v375
      %v377 = vrot.slane %v376, 4
      %v378 = vmax.f32 %v376, %v377
      %v379 = vrot.slane %v378, 2
      %v380 = vmax.f32 %v378, %v379
      %v381 = vrot.slane %v380, 1
      %v382 = vmax.f32 %v380, %v381
      %v383 = vsub.f32 %v293, %v369
      %v384 = vsub.f32 %v334, %v382
      %v385 = vsub.f32 %v296, %v369
      %v386 = vsub.f32 %v337, %v382
      %v387 = vsub.f32 %v299, %v369
      %v388 = vsub.f32 %v340, %v382
      %v389 = vsub.f32 %v302, %v369
      %v390 = vsub.f32 %v343, %v382
      %v391 = vsub.f32 %v305, %v369
      %v392 = vsub.f32 %v346, %v382
      %v393 = vsub.f32 %v308, %v369
      %v394 = vsub.f32 %v349, %v382
      %v395 = vsub.f32 %v311, %v369
      %v396 = vsub.f32 %v352, %v382
      %v397 = vsub.f32 %v314, %v369
      %v398 = vsub.f32 %v355, %v382
      %v399 = vmul.f32 %v383, 1.442695
      %v400 = vpow.pop %v399
      %v401 = vmul.f32 %v384, 1.442695
      %v402 = vpow.pop %v401
      %v403 = vmul.f32 %v385, 1.442695
      %v404 = vpow.pop %v403
      %v405 = vmul.f32 %v386, 1.442695
      %v406 = vpow.pop %v405
      %v407 = vmul.f32 %v387, 1.442695
      %v408 = vpow.pop %v407
      %v409 = vmul.f32 %v388, 1.442695
      %v410 = vpow.pop %v409
      %v411 = vmul.f32 %v389, 1.442695
      %v412 = vpow.pop %v411
      %v413 = vmul.f32 %v390, 1.442695
      %v414 = vpow.pop %v413
      %v415 = vmul.f32 %v391, 1.442695
      %v416 = vpow.pop %v415
      %v417 = vmul.f32 %v392, 1.442695
      %v418 = vpow.pop %v417
      %v419 = vmul.f32 %v393, 1.442695
      %v420 = vpow.pop %v419
      %v421 = vmul.f32 %v394, 1.442695
      %v422 = vpow.pop %v421
      %v423 = vmul.f32 %v395, 1.442695
      %v424 = vpow.pop %v423
      %v425 = vmul.f32 %v396, 1.442695
      %v426 = vpow.pop %v425
      %v427 = vmul.f32 %v397, 1.442695
      %v428 = vpow.pop %v427
      %v429 = vmul.f32 %v398, 1.442695
      %v430 = vpow.pop %v429
      %v431 = vadd.f32 %v400, %v404
      %v432 = vadd.f32 %v431, %v408
      %v433 = vadd.f32 %v432, %v412
      %v434 = vadd.f32 %v433, %v416
      %v435 = vadd.f32 %v434, %v420
      %v436 = vadd.f32 %v435, %v424
      %v437 = vadd.f32 %v436, %v428
      %v438 = vrot.slane %v437, 4
      %v439 = vadd.f32 %v437, %v438
      %v440 = vrot.slane %v439, 2
      %v441 = vadd.f32 %v439, %v440
      %v442 = vrot.slane %v441, 1
      %v443 = vadd.f32 %v441, %v442
      %v444 = vadd.f32 %v402, %v406
      %v445 = vadd.f32 %v444, %v410
      %v446 = vadd.f32 %v445, %v414
      %v447 = vadd.f32 %v446, %v418
      %v448 = vadd.f32 %v447, %v422
      %v449 = vadd.f32 %v448, %v426
      %v450 = vadd.f32 %v449, %v430
      %v451 = vrot.slane %v450, 4
      %v452 = vadd.f32 %v450, %v451
      %v453 = vrot.slane %v452, 2
      %v454 = vadd.f32 %v452, %v453
      %v455 = vrot.slane %v454, 1
      %v456 = vadd.f32 %v454, %v455
      %v457 = vmul.f32 %v443, 0.0025
      %v458 = vmul.f32 %v456, 0.0025
      %vm459 = vcmp.gt.f32.partialorder %v400, %v457
      %vm460 = vcmp.gt.f32.partialorder %v402, %v458
      %vm461 = vcmp.gt.f32.partialorder %v404, %v457
      %vm462 = vcmp.gt.f32.partialorder %v406, %v458
      %vm463 = vcmp.gt.f32.partialorder %v408, %v457
      %vm464 = vcmp.gt.f32.partialorder %v410, %v458
      %vm465 = vcmp.gt.f32.partialorder %v412, %v457
      %vm466 = vcmp.gt.f32.partialorder %v414, %v458
      %vm467 = vcmp.gt.f32.partialorder %v416, %v457
      %vm468 = vcmp.gt.f32.partialorder %v418, %v458
      %vm469 = vcmp.gt.f32.partialorder %v420, %v457
      %vm470 = vcmp.gt.f32.partialorder %v422, %v458
      %vm471 = vcmp.gt.f32.partialorder %v424, %v457
      %vm472 = vcmp.gt.f32.partialorder %v426, %v458
      %vm473 = vcmp.gt.f32.partialorder %v428, %v457
      %vm474 = vcmp.gt.f32.partialorder %v430, %v458
      %v475 = vsel %vm459, %v400, 0.0
      %v476 = vsel %vm460, %v402, 0.0
      %v477 = vsel %vm461, %v404, 0.0
      %v478 = vsel %vm462, %v406, 0.0
      %v479 = vsel %vm463, %v408, 0.0
      %v480 = vsel %vm464, %v410, 0.0
      %v481 = vsel %vm465, %v412, 0.0
      %v482 = vsel %vm466, %v414, 0.0
      %v483 = vsel %vm467, %v416, 0.0
      %v484 = vsel %vm468, %v418, 0.0
      %v485 = vsel %vm469, %v420, 0.0
      %v486 = vsel %vm470, %v422, 0.0
      %v487 = vsel %vm471, %v424, 0.0
      %v488 = vsel %vm472, %v426, 0.0
      %v489 = vsel %vm473, %v428, 0.0
      %v490 = vsel %vm474, %v430, 0.0
      %v491 = vadd.f32 %v475, %v477
      %v492 = vadd.f32 %v491, %v479
      %v493 = vadd.f32 %v492, %v481
      %v494 = vadd.f32 %v493, %v483
      %v495 = vadd.f32 %v494, %v485
      %v496 = vadd.f32 %v495, %v487
      %v497 = vadd.f32 %v496, %v489
      %v498 = vrot.slane %v497, 4
      %v499 = vadd.f32 %v497, %v498
      %v500 = vrot.slane %v499, 2
      %v501 = vadd.f32 %v499, %v500
      %v502 = vrot.slane %v501, 1
      %v503 = vadd.f32 %v501, %v502
      %v504 = vadd.f32 %v476, %v478
      %v505 = vadd.f32 %v504, %v480
      %v506 = vadd.f32 %v505, %v482
      %v507 = vadd.f32 %v506, %v484
      %v508 = vadd.f32 %v507, %v486
      %v509 = vadd.f32 %v508, %v488
      %v510 = vadd.f32 %v509, %v490
      %v511 = vrot.slane %v510, 4
      %v512 = vadd.f32 %v510, %v511
      %v513 = vrot.slane %v512, 2
      %v514 = vadd.f32 %v512, %v513
      %v515 = vrot.slane %v514, 1
      %v516 = vadd.f32 %v514, %v515
      %v517 = vmax.f32 %v503, 1e-12
      %v518 = vmax.f32 %v516, 1e-12
      %v519 = vrcp.pop %v517
      %v520 = vrcp.pop %v518
      %v521 = vmul.f32 %v475, %v519
      %v522 = vmul.f32 %v476, %v520
      %v523 = vmul.f32 %v477, %v519
      %v524 = vmul.f32 %v478, %v520
      %v525 = vmul.f32 %v479, %v519
      %v526 = vmul.f32 %v480, %v520
      %v527 = vmul.f32 %v481, %v519
      %v528 = vmul.f32 %v482, %v520
      %v529 = vmul.f32 %v483, %v519
      %v530 = vmul.f32 %v484, %v520
      %v531 = vmul.f32 %v485, %v519
      %v532 = vmul.f32 %v486, %v520
      %v533 = vmul.f32 %v487, %v519
      %v534 = vmul.f32 %v488, %v520
      %v535 = vmul.f32 %v489, %v519
      %v536 = vmul.f32 %v490, %v520
      %537 = vxpose.xlu0.b32.start [1/16] %v242, 128
      %538 = vxpose.xlu0.b32.cont [2/16] %v243, 128
      %539 = vxpose.xlu0.b32.cont [3/16] %v244, 128
      %540 = vxpose.xlu0.b32.cont [4/16] %v245, 128
      %541 = vxpose.xlu0.b32.cont [5/16] %v246, 128
      %542 = vxpose.xlu0.b32.cont [6/16] %v247, 128
      %543 = vxpose.xlu0.b32.cont [7/16] %v248, 128
      %544 = vxpose.xlu0.b32.cont [8/16] %v249, 128
      %545 = vxpose.xlu0.b32.cont [9/16] 0.0, 128
      %546 = vxpose.xlu0.b32.cont [10/16] 0.0, 128
      %547 = vxpose.xlu0.b32.cont [11/16] 0.0, 128
      %548 = vxpose.xlu0.b32.cont [12/16] 0.0, 128
      %549 = vxpose.xlu0.b32.cont [13/16] 0.0, 128
      %550 = vxpose.xlu0.b32.cont [14/16] 0.0, 128
      %551 = vxpose.xlu0.b32.cont [15/16] 0.0, 128
      %552 = vxpose.xlu0.b32.end [16/16] 0.0, 128
      %v553 = vpop.trf.xlu0
      %v554 = vpop.trf.xlu0
      %v555 = vpop.trf.xlu0
      %v556 = vpop.trf.xlu0
      %v557 = vpop.trf.xlu0
      %v558 = vpop.trf.xlu0
      %v559 = vpop.trf.xlu0
      %v560 = vpop.trf.xlu0
      %v561 = vpop.trf.xlu0
      %v562 = vpop.trf.xlu0
      %v563 = vpop.trf.xlu0
      %v564 = vpop.trf.xlu0
      %v565 = vpop.trf.xlu0
      %v566 = vpop.trf.xlu0
      %v567 = vpop.trf.xlu0
      %v568 = vpop.trf.xlu0
      %vm569 = vcmask 523264
      %v571 = vsel %vm569, %v553, 0
      %v574 = vsel %vm569, %v554, 0
      %v577 = vsel %vm569, %v555, 0
      %v580 = vsel %vm569, %v556, 0
      %582 = vmatpush.msra.mxu0 0.0
      %583 = vmatpush.msra.mxu0 0.0
      %584 = vmatpush.msra.mxu0 0.0
      %585 = vmatpush.msra.mxu0 0.0
      %586 = vmatpush.msra.mxu0 0.0
      %587 = vmatpush.msra.mxu0 0.0
      %588 = vmatpush.msra.mxu0 0.0
      %589 = vmatpush.msra.mxu0 0.0
      %590 = vmatpush.msra.mxu0 %v535
      %591 = vmatpush.msra.mxu0 %v533
      %592 = vmatpush.msra.mxu0 %v531
      %593 = vmatpush.msra.mxu0 %v529
      %594 = vmatpush.msra.mxu0 %v527
      %595 = vmatpush.msra.mxu0 %v525
      %596 = vmatpush.msra.mxu0 %v523
      %597 = vmatpush.msra.mxu0 %v521
      %598 = vmatmul.f32.gmra.mxu0 %v571
      %v599 = vpop.f32.mrf.mxu0
      %v600 = vadd.f32 0.0, %v599
      %601 = vmatmul.f32.gmra.mxu0 %v574
      %v602 = vpop.f32.mrf.mxu0
      %v603 = vadd.f32 0.0, %v602
      %604 = vmatmul.f32.gmra.mxu0 %v577
      %v605 = vpop.f32.mrf.mxu0
      %v606 = vadd.f32 0.0, %v605
      %607 = vmatmul.f32.gmra.mxu0 %v580
      %v608 = vpop.f32.mrf.mxu0
      %v609 = vadd.f32 0.0, %v608
      %610 = vdwg.mxu0
      %611 = vmatpush.msra.mxu0 0.0
      %612 = vmatpush.msra.mxu0 0.0
      %613 = vmatpush.msra.mxu0 0.0
      %614 = vmatpush.msra.mxu0 0.0
      %615 = vmatpush.msra.mxu0 0.0
      %616 = vmatpush.msra.mxu0 0.0
      %617 = vmatpush.msra.mxu0 0.0
      %618 = vmatpush.msra.mxu0 0.0
      %619 = vmatpush.msra.mxu0 %v536
      %620 = vmatpush.msra.mxu0 %v534
      %621 = vmatpush.msra.mxu0 %v532
      %622 = vmatpush.msra.mxu0 %v530
      %623 = vmatpush.msra.mxu0 %v528
      %624 = vmatpush.msra.mxu0 %v526
      %625 = vmatpush.msra.mxu0 %v524
      %626 = vmatpush.msra.mxu0 %v522
      %627 = vmatmul.f32.gmra.mxu0 %v571
      %v628 = vpop.f32.mrf.mxu0
      %v629 = vadd.f32 0.0, %v628
      %630 = vmatmul.f32.gmra.mxu0 %v574
      %v631 = vpop.f32.mrf.mxu0
      %v632 = vadd.f32 0.0, %v631
      %633 = vmatmul.f32.gmra.mxu0 %v577
      %v634 = vpop.f32.mrf.mxu0
      %v635 = vadd.f32 0.0, %v634
      %636 = vmatmul.f32.gmra.mxu0 %v580
      %v637 = vpop.f32.mrf.mxu0
      %v638 = vadd.f32 0.0, %v637
      %639 = vdwg.mxu0
      %640 = vst [vmem:[%s222] sm:$0xff] %v600
      %641 = vst [vmem:[%s222 + $0x8] sm:$0xff] %v629
      %642 = vst [vmem:[%s222 + $0x10] sm:$0xff] %v603
      %643 = vst [vmem:[%s222 + $0x18] sm:$0xff] %v632
      %644 = vst [vmem:[%s222 + $0x20] sm:$0xff] %v606
      %645 = vst [vmem:[%s222 + $0x28] sm:$0xff] %v635
      %646 = vst [vmem:[%s222 + $0x30] sm:$0xff] %v609
      %647 = vst [vmem:[%s222 + $0x38] sm:$0xff] %v638
      %648 = vst [vmem:[%s232] sm:$0xff] %v521
      %649 = vst [vmem:[%s232 + $0x8] sm:$0xff] %v522
      %650 = vst [vmem:[%s232 + $0x10] sm:$0xff] %v523
      %651 = vst [vmem:[%s232 + $0x18] sm:$0xff] %v524
      %652 = vst [vmem:[%s232 + $0x20] sm:$0xff] %v525
      %653 = vst [vmem:[%s232 + $0x28] sm:$0xff] %v526
      %654 = vst [vmem:[%s232 + $0x30] sm:$0xff] %v527
      %655 = vst [vmem:[%s232 + $0x38] sm:$0xff] %v528
      %656 = vst [vmem:[%s232 + $0x40] sm:$0xff] %v529
      %657 = vst [vmem:[%s232 + $0x48] sm:$0xff] %v530
      %658 = vst [vmem:[%s232 + $0x50] sm:$0xff] %v531
      %659 = vst [vmem:[%s232 + $0x58] sm:$0xff] %v532
      %660 = vst [vmem:[%s232 + $0x60] sm:$0xff] %v533
      %661 = vst [vmem:[%s232 + $0x68] sm:$0xff] %v534
      %662 = vst [vmem:[%s232 + $0x70] sm:$0xff] %v535
      %663 = vst [vmem:[%s232 + $0x78] sm:$0xff] %v536
      %s664 = smul.u32 2, %s20
      %p665 = scmp.lt.s32.totalorder %s19, 1
      %s666 = scalar_select %p665, %s19, 1
      %p667 = scmp.lt.s32.totalorder %s664, 1
      %s668 = scalar_select %p667, %s664, 1
      %s669 = smul.addr %s666, 8
      %s670 = sadd.s32 %s668, %s669
      %s671 = smul.addr %s670, 8
      %s672 = scalar_lea.vmem %s2, %s671
      %s673 = smul.u32 2, %s20
      %p674 = scmp.lt.s32.totalorder %s19, 1
      %s675 = scalar_select %p674, %s19, 1
      %p676 = scmp.lt.s32.totalorder %s673, 1
      %s677 = scalar_select %p676, %s673, 1
      %s678 = smul.addr %s675, 16
      %s679 = sadd.s32 %s677, %s678
      %s680 = smul.addr %s679, 8
      %s681 = scalar_lea.vmem %s3, %s680
      // Predicated region
      $region29: #{mem_module_forward.1} parent=27 // pred_check
        %p682 = pneg %p96
      $region30: #{mem_module_forward.1} parent=27 // pred_check_branch
        %684 = sbr.rel (%p682) target = $region32
      $region31: #{mem_module_forward.1} parent=27 // pred_region
        %s685 = smul.u32 2, %s20
      $region32: #{mem_module_forward.1} parent=27 // pred_fallthru
        _
      // Predicated region
      $region33: #{mem_module_forward.1} parent=27 // pred_check
        %p686 = pneg %p124
      $region34: #{mem_module_forward.1} parent=27 // pred_check_branch
        %688 = sbr.rel (%p686) target = $region36
      $region35: #{mem_module_forward.1} parent=27 // pred_region
        %s689 = smul.u32 2, %s20
      $region36: #{mem_module_forward.1} parent=27 // pred_fallthru
        _
    $region28: #{mem_module_forward.1} parent=5 // pred_fallthru
      _
    %p690 = scmp.le.s32.totalorder 2, %s10
    // Predicated region
    $region37: #{mem_module_forward.1} parent=5 // pred_check
      %p691 = pneg %p690
    $region38: #{mem_module_forward.1} parent=5 // pred_check_branch
      %693 = sbr.rel (%p691) target = $region40
    $region39: #{mem_module_forward.1} parent=5 // pred_region
      %s694 = ssub.s32 %s10, 2
      // Predicated region
      $region41: #{mem_module_forward.1} parent=39 // pred_check
        %p695 = pneg %p102
      $region42: #{mem_module_forward.1} parent=39 // pred_check_branch
        %697 = sbr.rel (%p695) target = $region44
      $region43: #{mem_module_forward.1} parent=39 // pred_region
        %s698 = smul.u32 2, %s22
        %p699 = scmp.lt.s32.totalorder %s21, 1
        %s700 = scalar_select %p699, %s21, 1
        %p701 = scmp.lt.s32.totalorder %s698, 1
        %s702 = scalar_select %p701, %s698, 1
        %s703 = smul.addr %s700, 8
        %s704 = sadd.s32 %s702, %s703
        %s705 = smul.addr %s704, 8
        %s706 = scalar_lea.vmem %s2, %s705
      $region44: #{mem_module_forward.1} parent=39 // pred_fallthru
        _
      // Predicated region
      $region45: #{mem_module_forward.1} parent=39 // pred_check
        %p707 = pneg %p130
      $region46: #{mem_module_forward.1} parent=39 // pred_check_branch
        %709 = sbr.rel (%p707) target = $region48
      $region47: #{mem_module_forward.1} parent=39 // pred_region
        %s710 = smul.u32 2, %s22
        %p711 = scmp.lt.s32.totalorder %s21, 1
        %s712 = scalar_select %p711, %s21, 1
        %p713 = scmp.lt.s32.totalorder %s710, 1
        %s714 = scalar_select %p713, %s710, 1
        %s715 = smul.addr %s712, 16
        %s716 = sadd.s32 %s714, %s715
        %s717 = smul.addr %s716, 8
        %s718 = scalar_lea.vmem %s3, %s717
      $region48: #{mem_module_forward.1} parent=39 // pred_fallthru
        _
    $region40: #{mem_module_forward.1} parent=5 // pred_fallthru
      _
  $region6: #{mem_module_forward.1} parent=0 // loop_footer
    %s14 = sadd.s32 1, %s10
  $region7: #{mem_module_forward.1} parent=0 // loop_footer_branch
    %9 = sbr.rel target = $region3
  $region8: #{mem_module_forward.1} parent=0 // loop_exit
    _

</llo_original>
